<compile_context>
chip_gen: v7x
topology: tpu7x:2x2x1
jax: 0.10.0
libtpu: 0.0.40
codegen_flags: <defaults>
</compile_context>

<pallas_src>
import jax
import jax.numpy as jnp
from jax import lax
from jax.experimental import pallas as pl
from jax.experimental.pallas import tpu as pltpu


def joint_kernel(fv_ref, ft_ref,
                 wfT_ref, bf_ref,      # fused [visual_conv_1 | visual_conv_2[0]]: (Cout,3C), (Cout,1)
                 wt_ref, bt_ref,       # fused [textual_fc_1 | textual_fc_2]: (C,2C), (1,2C)
                 w2b_ref, b2b_ref,     # visual_conv_2 second 1x1: (C/2,C), (1,C)
                 w3_ref, b3_ref,       # joint_embedding conv (BN folded): (2C,2C), (1,2C)
                 out_ref):
    bb, c3, hw = fv_ref.shape
    cout = wfT_ref.shape[0]            # C + C/2
    c = w2b_ref.shape[1]               # feat_dim

    # ---- fused visual 1x1 convs, batched on the MXU in native NCHW layout ----
    # per batch: wfT (Cout,3C) @ fv_b (3C,HW) -> (Cout,HW).  K=3C is already fv's
    # sublane dim and wfT's lane dim, so no XLU transpose and no concat copy.
    fvb = fv_ref[...].astype(jnp.bfloat16)                        # (bb, 3C, HW)
    wfb = jnp.broadcast_to(wfT_ref[...], (bb, cout, c3))          # small bf16 bcast
    u = lax.dot_general(wfb, fvb,
                        dimension_numbers=(((2,), (1,)), ((0,), (0,))),
                        preferred_element_type=jnp.float32)       # (bb, Cout, HW)
    u = jnp.maximum(u + bf_ref[...], 0.0)

    # ---- global average pool, hoisted through all downstream linear ops ------
    m = jnp.mean(u, axis=-1)                                      # (bb, Cout)
    m_fv1 = m[:, :c]     # mean_hw(relu(visual_conv_1(fv)))
    m_h = m[:, c:]       # mean_hw(relu(visual_conv_2[0](fv)))

    # ---- fused textual fcs (tiny, f32 to keep the sigmoid gate accurate) -----
    ftr = ft_ref[...].reshape(bb, c)                              # (bb, C)
    t = jnp.dot(ftr, wt_ref[...], preferred_element_type=jnp.float32) + bt_ref[...]
    ft1 = t[:, :c]
    ft2 = t[:, c:]

    # visual_refinement + pool: mean(fv1 * (1 + ft1)) = mean(fv1) * (1 + ft1)
    m_fvr = m_fv1 * (1.0 + ft1)                                   # (bb, C)
    # textual_refinement: gate = sigmoid(mean(fv2)) = sigmoid(mean(h) @ w2b + b2b)
    gate = jax.nn.sigmoid(
        jnp.dot(m_h, w2b_ref[...], preferred_element_type=jnp.float32) + b2b_ref[...])
    ft_r = ft2 * (1.0 + gate)                                     # (bb, C)

    # joint_embedding + pool: mean(fvt + conv(fvt)) = m + m @ w3 + b3, with
    # m = [mean(fv_refined) | ft_refined] (ft block is constant over HW).
    m_fvt = jnp.concatenate([m_fvr, ft_r], axis=1)                # (bb, 2C)
    y = m_fvt + jnp.dot(m_fvt, w3_ref[...],
                        preferred_element_type=jnp.float32) + b3_ref[...]
    out_ref[...] = y.reshape(out_ref.shape)                       # single store


def _fold_bn(w, b, gamma, beta, running_mean, running_var, eps=1e-5):
    """Fold eval-mode BatchNorm into a 1x1 conv (w: (Cin, Cout), b: (1, Cout))."""
    scale = gamma / jnp.sqrt(running_var + eps)
    return w * scale[None, :], (b - running_mean[None, :]) * scale[None, :] + beta[None, :]


def init_params(key, feat_dim):
    C = feat_dim
    C3, C2, CC = 3 * C, C // 2, 2 * C
    ks = jax.random.split(key, 12)

    def u(k, shape, fan_in):
        bound = 1.0 / jnp.sqrt(jnp.float32(fan_in))
        return jax.random.uniform(k, shape, jnp.float32, -bound, bound)

    # visual_conv_1: Conv2d(3C, C, 1) + BN(C)
    w1 = u(ks[0], (C3, C), C3)
    b1 = u(ks[1], (1, C), C3)
    w1, b1 = _fold_bn(w1, b1, jnp.ones((C,)), jnp.zeros((C,)),
                      jnp.zeros((C,)), jnp.ones((C,)))
    # textual_fc_1: Linear(C, C)
    wt1 = u(ks[2], (C, C), C)
    bt1 = u(ks[3], (1, C), C)
    # visual_conv_2: Conv2d(3C, C/2, 1) -> ReLU -> Conv2d(C/2, C, 1)
    w2a = u(ks[4], (C3, C2), C3)
    b2a = u(ks[5], (1, C2), C3)
    w2b = u(ks[6], (C2, C), C2)
    b2b = u(ks[7], (1, C), C2)
    # textual_fc_2: Linear(C, C)
    wt2 = u(ks[8], (C, C), C)
    bt2 = u(ks[9], (1, C), C)
    # joint_embedding: Conv2d(2C, 2C, 1) + BN(2C)
    w3 = u(ks[10], (CC, CC), CC)
    b3 = u(ks[11], (1, CC), CC)
    w3, b3 = _fold_bn(w3, b3, jnp.ones((CC,)), jnp.zeros((CC,)),
                      jnp.zeros((CC,)), jnp.ones((CC,)))
    return (w1, b1, wt1, bt1, w2a, b2a, w2b, b2b, wt2, bt2, w3, b3)


def _vmem_capacity():
    try:
        return int(pltpu.get_tpu_info().vmem_capacity_bytes)
    except Exception:
        return 64 << 20   # conservative fallback (v7x per-TensorCore VMEM)


def _per_batch_vmem_bytes(C, HW, in_itemsize):
    # double-buffered fv input + bf16 copy + f32 pre-pool acts (1.5C x HW)
    # + per-batch broadcast of the fused bf16 weight (1.5C x 3C).
    return 3 * C * HW * (2 * in_itemsize + 2) + 6 * C * HW + 9 * C * C


def _pick_block_b(B, C, HW, in_itemsize, vmem_cap):
    """Generation-aware batch blocking: budget the full per-step working set
    against this chip's VMEM, and only split the grid for megacore when each
    step keeps meaningful work (>= ~512 HW rows)."""
    usable = (vmem_cap * 3) // 4
    fixed = 35 * C * C + (256 << 10)                      # resident fused weights + slack
    per_batch = _per_batch_vmem_bytes(C, HW, in_itemsize)
    cap = max(1, (usable - fixed) // per_batch)
    divisors = [d for d in range(1, B + 1) if B % d == 0 and d <= cap]
    block_b = max(divisors) if divisors else 1
    if block_b == B and B >= 2:
        split = [d for d in divisors if B // d >= 2 and d * HW >= 512]
        if split:
            block_b = max(split)
    return block_b


def joint_module_forward(fv, ft, params, *, block_b=None):
    """fv: (B, 3C, H, W) NCHW; ft: (B, C) -> (B, 2C)."""
    B, C3, H, W = fv.shape
    C = C3 // 3
    HW = H * W
    vmem_cap = _vmem_capacity()
    in_itemsize = jnp.dtype(fv.dtype).itemsize
    if block_b is None:
        block_b = _pick_block_b(B, C, HW, in_itemsize, vmem_cap)
    assert B % block_b == 0
    num_steps = B // block_b

    # Free reshapes only: fv stays in NCHW (no HBM transpose) and keeps its dtype
    # (a bf16 producer halves HBM read traffic with no kernel change).
    fv3 = fv.reshape(B, C3, HW)
    ft3 = ft.reshape(B, 1, C).astype(jnp.float32)

    (w1, b1, wt1, bt1, w2a, b2a, w2b, b2b, wt2, bt2, w3, b3) = params
    # Fuse along Cout and pre-transpose so the MXU consumes the NCHW block directly.
    wfT = jnp.concatenate([w1, w2a], axis=1).T.astype(jnp.bfloat16)   # (C+C/2, 3C)
    bfv = jnp.concatenate([b1, b2a], axis=1).T                        # (C+C/2, 1)
    wt = jnp.concatenate([wt1, wt2], axis=1)                          # (C, 2C)
    bt = jnp.concatenate([bt1, bt2], axis=1)                          # (1, 2C)

    def wspec(arr):
        nd = arr.ndim
        return pl.BlockSpec(arr.shape, lambda i, _nd=nd: (0,) * _nd)

    fv_kwargs = {}
    if num_steps >= 3:
        # Deepen the fv input pipeline only when there are enough steps to fill it.
        fv_kwargs["pipeline_mode"] = pl.Buffered(3)
    fv_spec = pl.BlockSpec((block_b, C3, HW), lambda i: (i, 0, 0), **fv_kwargs)

    # Explicit VMEM limit: cover the estimated working set with headroom while
    # staying inside physical VMEM on every generation (64 MiB v7x, 128 MiB v5e/v6e).
    est_step = 35 * C * C + block_b * _per_batch_vmem_bytes(C, HW, in_itemsize) + (1 << 20)
    vmem_limit = int(min((vmem_cap * 3) // 4, max(32 << 20, 2 * est_step)))

    out = pl.pallas_call(
        joint_kernel,
        out_shape=jax.ShapeDtypeStruct((B, 1, 2 * C), jnp.float32),
        grid_spec=pltpu.PrefetchScalarGridSpec(
            num_scalar_prefetch=0,
            grid=(num_steps,),
            in_specs=[
                fv_spec,                                               # fv (NCHW)
                pl.BlockSpec((block_b, 1, C), lambda i: (i, 0, 0)),    # ft
                wspec(wfT), wspec(bfv),
                wspec(wt), wspec(bt),
                wspec(w2b), wspec(b2b),
                wspec(w3), wspec(b3),
            ],
            out_specs=pl.BlockSpec((block_b, 1, 2 * C), lambda i: (i, 0, 0)),
        ),
        compiler_params=pltpu.CompilerParams(
            dimension_semantics=("parallel",),
            vmem_limit_bytes=vmem_limit),
    )(fv3, ft3, wfT, bfv, wt, bt, w2b, b2b, w3, b3)
    return out.reshape(B, 2 * C)


def joint_module_ref(fv, ft, params):
    """Pure-JAX f32 reference (no fusion, no mean-hoisting) for sanity checking."""
    (w1, b1, wt1, bt1, w2a, b2a, w2b, b2b, wt2, bt2, w3, b3) = params
    B, C3, H, W = fv.shape
    x = jnp.transpose(fv, (0, 2, 3, 1)).reshape(B, H * W, C3)
    fv1 = jnp.maximum(x @ w1 + b1, 0.0)
    ft1 = ft @ wt1 + bt1
    fv_refined = fv1 * (1.0 + ft1[:, None, :])
    h = jnp.maximum(x @ w2a + b2a, 0.0)
    fv2 = h @ w2b + b2b
    ft2 = ft @ wt2 + bt2
    gate = jax.nn.sigmoid(jnp.mean(fv2, axis=1))
    ft_refined = ft2 + ft2 * gate
    fvt = jnp.concatenate(
        [fv_refined, jnp.broadcast_to(ft_refined[:, None, :], fv_refined.shape)],
        axis=-1)
    y = fvt + (fvt @ w3 + b3)
    return jnp.mean(y, axis=1)


if __name__ == "__main__":
    B, feat_dim, H, W = 2, 32, 8, 8
    key = jax.random.PRNGKey(0)
    k_fv, k_ft, k_p = jax.random.split(key, 3)
    fv = jax.random.normal(k_fv, (B, 3 * feat_dim, H, W), jnp.float32)
    ft = jax.random.normal(k_ft, (B, feat_dim), jnp.float32)
    params = init_params(k_p, feat_dim)

    out = joint_module_forward(fv, ft, params)
    jax.block_until_ready(out)

    ref = joint_module_ref(fv, ft, params)
    assert out.shape == (B, 2 * feat_dim), out.shape
    assert jnp.allclose(out, ref, rtol=1e-2, atol=1e-2), (
        float(jnp.max(jnp.abs(out - ref))))
    print("KERNEL_OK")
</pallas_src>

<mosaic_0001>
module attributes {stable_mosaic.version = 11 : i64} {
  func.func @joint_kernel(%arg0: i32, %arg1: memref<2x96x64xf32, #tpu.memory_space<vmem>>, %arg2: memref<2x1x32xf32, #tpu.memory_space<vmem>>, %arg3: memref<48x96xbf16, #tpu.memory_space<vmem>>, %arg4: memref<48x1xf32, #tpu.memory_space<vmem>>, %arg5: memref<32x64xf32, #tpu.memory_space<vmem>>, %arg6: memref<1x64xf32, #tpu.memory_space<vmem>>, %arg7: memref<16x32xf32, #tpu.memory_space<vmem>>, %arg8: memref<1x32xf32, #tpu.memory_space<vmem>>, %arg9: memref<64x64xf32, #tpu.memory_space<vmem>>, %arg10: memref<1x64xf32, #tpu.memory_space<vmem>>, %arg11: memref<2x1x64xf32, #tpu.memory_space<vmem>>) attributes {dimension_semantics = [#tpu.dimension_semantics<parallel>], iteration_bounds = array<i64: 1>, scalar_prefetch = 0 : i64, scratch_operands = 0 : i64, tpu.core_type = #tpu.core_type<tc>, window_params = [{transform_indices = @transform_0, window_bounds = array<i64: 2, 96, 64>}, {transform_indices = @transform_1, window_bounds = array<i64: 2, 1, 32>}, {pipeline_mode = #tpu.pipeline_mode<synchronous>, transform_indices = @transform_2, window_bounds = array<i64: 48, 96>}, {pipeline_mode = #tpu.pipeline_mode<synchronous>, transform_indices = @transform_3, window_bounds = array<i64: 48, 1>}, {pipeline_mode = #tpu.pipeline_mode<synchronous>, transform_indices = @transform_4, window_bounds = array<i64: 32, 64>}, {pipeline_mode = #tpu.pipeline_mode<synchronous>, transform_indices = @transform_5, window_bounds = array<i64: 1, 64>}, {pipeline_mode = #tpu.pipeline_mode<synchronous>, transform_indices = @transform_6, window_bounds = array<i64: 16, 32>}, {pipeline_mode = #tpu.pipeline_mode<synchronous>, transform_indices = @transform_7, window_bounds = array<i64: 1, 32>}, {pipeline_mode = #tpu.pipeline_mode<synchronous>, transform_indices = @transform_8, window_bounds = array<i64: 64, 64>}, {pipeline_mode = #tpu.pipeline_mode<synchronous>, transform_indices = @transform_9, window_bounds = array<i64: 1, 64>}, {transform_indices = @transform_10, window_bounds = array<i64: 2, 1, 64>}]} {
    %c0 = arith.constant 0 : index
    %c0_0 = arith.constant 0 : index
    %c0_1 = arith.constant 0 : index
    %0 = vector.load %arg1[%c0, %c0_0, %c0_1] : memref<2x96x64xf32, #tpu.memory_space<vmem>>, vector<2x96x64xf32>
    %1 = arith.truncf %0 : vector<2x96x64xf32> to vector<2x96x64xbf16>
    %c0_2 = arith.constant 0 : index
    %c0_3 = arith.constant 0 : index
    %2 = vector.load %arg3[%c0_2, %c0_3] : memref<48x96xbf16, #tpu.memory_space<vmem>>, vector<48x96xbf16>
    %3 = vector.shape_cast %2 : vector<48x96xbf16> to vector<1x48x96xbf16>
    %4 = vector.broadcast %3 : vector<1x48x96xbf16> to vector<2x48x96xbf16>
    %cst = arith.constant dense<0.000000e+00> : vector<2x48x64xf32>
    %5 = tpu.matmul %4, %1, %cst {dimension_numbers = #tpu.dot_dimension_numbers<[2], [1], [1], [2], [0, 0, 0, 1, 1, 2], [0], [0]>} : vector<2x48x96xbf16>, vector<2x96x64xbf16>, vector<2x48x64xf32> -> vector<2x48x64xf32>
    %c0_4 = arith.constant 0 : index
    %c0_5 = arith.constant 0 : index
    %6 = vector.load %arg4[%c0_4, %c0_5] : memref<48x1xf32, #tpu.memory_space<vmem>>, vector<48x1xf32>
    %7 = vector.shape_cast %6 : vector<48x1xf32> to vector<1x48x1xf32>
    %8 = vector.broadcast %7 : vector<1x48x1xf32> to vector<2x48x64xf32>
    %9 = arith.addf %5, %8 : vector<2x48x64xf32>
    %cst_6 = arith.constant 0.000000e+00 : f32
    %10 = vector.broadcast %cst_6 : f32 to vector<2x48x64xf32>
    %11 = arith.maximumf %9, %10 : vector<2x48x64xf32>
    %cst_7 = arith.constant dense<0.000000e+00> : vector<2x48xf32>
    %12 = vector.multi_reduction <add>, %11, %cst_7 [2] : vector<2x48x64xf32> to vector<2x48xf32>
    %cst_8 = arith.constant 6.400000e+01 : f32
    %13 = vector.broadcast %cst_8 : f32 to vector<2x48xf32>
    %14 = arith.divf %12, %13 : vector<2x48xf32>
    %15 = vector.extract_strided_slice %14 {offsets = [0, 0], sizes = [2, 32], strides = [1, 1]} : vector<2x48xf32> to vector<2x32xf32>
    %16 = vector.extract_strided_slice %14 {offsets = [0, 32], sizes = [2, 16], strides = [1, 1]} : vector<2x48xf32> to vector<2x16xf32>
    %c0_9 = arith.constant 0 : index
    %c0_10 = arith.constant 0 : index
    %c0_11 = arith.constant 0 : index
    %17 = vector.load %arg2[%c0_9, %c0_10, %c0_11] : memref<2x1x32xf32, #tpu.memory_space<vmem>>, vector<2x1x32xf32>
    %18 = vector.shape_cast %17 : vector<2x1x32xf32> to vector<2x32xf32>
    %c0_12 = arith.constant 0 : index
    %c0_13 = arith.constant 0 : index
    %19 = vector.load %arg5[%c0_12, %c0_13] : memref<32x64xf32, #tpu.memory_space<vmem>>, vector<32x64xf32>
    %cst_14 = arith.constant dense<0.000000e+00> : vector<2x64xf32>
    %20 = tpu.matmul %18, %19, %cst_14 {dimension_numbers = #tpu.dot_dimension_numbers<[1], [0], [0], [1], [0, 0, 1, 1], [], []>} : vector<2x32xf32>, vector<32x64xf32>, vector<2x64xf32> -> vector<2x64xf32>
    %c0_15 = arith.constant 0 : index
    %c0_16 = arith.constant 0 : index
    %21 = vector.load %arg6[%c0_15, %c0_16] : memref<1x64xf32, #tpu.memory_space<vmem>>, vector<1x64xf32>
    %22 = vector.broadcast %21 : vector<1x64xf32> to vector<2x64xf32>
    %23 = arith.addf %20, %22 : vector<2x64xf32>
    %24 = vector.extract_strided_slice %23 {offsets = [0, 0], sizes = [2, 32], strides = [1, 1]} : vector<2x64xf32> to vector<2x32xf32>
    %25 = vector.extract_strided_slice %23 {offsets = [0, 32], sizes = [2, 32], strides = [1, 1]} : vector<2x64xf32> to vector<2x32xf32>
    %cst_17 = arith.constant 1.000000e+00 : f32
    %26 = vector.broadcast %cst_17 : f32 to vector<2x32xf32>
    %27 = arith.addf %26, %24 : vector<2x32xf32>
    %28 = arith.mulf %15, %27 : vector<2x32xf32>
    %c0_18 = arith.constant 0 : index
    %c0_19 = arith.constant 0 : index
    %29 = vector.load %arg7[%c0_18, %c0_19] : memref<16x32xf32, #tpu.memory_space<vmem>>, vector<16x32xf32>
    %cst_20 = arith.constant dense<0.000000e+00> : vector<2x32xf32>
    %30 = tpu.matmul %16, %29, %cst_20 {dimension_numbers = #tpu.dot_dimension_numbers<[1], [0], [0], [1], [0, 0, 1, 1], [], []>} : vector<2x16xf32>, vector<16x32xf32>, vector<2x32xf32> -> vector<2x32xf32>
    %c0_21 = arith.constant 0 : index
    %c0_22 = arith.constant 0 : index
    %31 = vector.load %arg8[%c0_21, %c0_22] : memref<1x32xf32, #tpu.memory_space<vmem>>, vector<1x32xf32>
    %32 = vector.broadcast %31 : vector<1x32xf32> to vector<2x32xf32>
    %33 = arith.addf %30, %32 : vector<2x32xf32>
    %34 = arith.negf %33 : vector<2x32xf32>
    %35 = math.exp %34 : vector<2x32xf32>
    %cst_23 = arith.constant 1.000000e+00 : f32
    %36 = vector.broadcast %cst_23 : f32 to vector<2x32xf32>
    %37 = arith.addf %36, %35 : vector<2x32xf32>
    %38 = arith.divf %36, %37 : vector<2x32xf32>
    %cst_24 = arith.constant 1.000000e+00 : f32
    %39 = vector.broadcast %cst_24 : f32 to vector<2x32xf32>
    %40 = arith.addf %39, %38 : vector<2x32xf32>
    %41 = arith.mulf %25, %40 : vector<2x32xf32>
    %42 = tpu.concatenate %28, %41 in 1 : vector<2x32xf32>, vector<2x32xf32> -> vector<2x64xf32>
    %c0_25 = arith.constant 0 : index
    %c0_26 = arith.constant 0 : index
    %43 = vector.load %arg9[%c0_25, %c0_26] : memref<64x64xf32, #tpu.memory_space<vmem>>, vector<64x64xf32>
    %cst_27 = arith.constant dense<0.000000e+00> : vector<2x64xf32>
    %44 = tpu.matmul %42, %43, %cst_27 {dimension_numbers = #tpu.dot_dimension_numbers<[1], [0], [0], [1], [0, 0, 1, 1], [], []>} : vector<2x64xf32>, vector<64x64xf32>, vector<2x64xf32> -> vector<2x64xf32>
    %45 = arith.addf %42, %44 : vector<2x64xf32>
    %c0_28 = arith.constant 0 : index
    %c0_29 = arith.constant 0 : index
    %46 = vector.load %arg10[%c0_28, %c0_29] : memref<1x64xf32, #tpu.memory_space<vmem>>, vector<1x64xf32>
    %47 = vector.broadcast %46 : vector<1x64xf32> to vector<2x64xf32>
    %48 = arith.addf %45, %47 : vector<2x64xf32>
    %49 = vector.shape_cast %48 : vector<2x64xf32> to vector<2x1x64xf32>
    %c0_30 = arith.constant 0 : index
    %c0_31 = arith.constant 0 : index
    %c0_32 = arith.constant 0 : index
    %50 = vector.load %arg11[%c0_30, %c0_31, %c0_32] : memref<2x1x64xf32, #tpu.memory_space<vmem>>, vector<2x1x64xf32>
    tpu.vector_store %arg11[%c0_30, %c0_31, %c0_32], %49 {strides = array<i32>} : memref<2x1x64xf32, #tpu.memory_space<vmem>>, vector<2x1x64xf32>,
    return
  }
  func.func @transform_0(%arg0: i32) -> (i32, i32, i32) {
    %c0_i32 = arith.constant 0 : i32
    %c0_i32_0 = arith.constant 0 : i32
    %c0_i32_1 = arith.constant 0 : i32
    return %arg0, %c0_i32, %c0_i32_0 : i32, i32, i32
  }
  func.func @transform_1(%arg0: i32) -> (i32, i32, i32) {
    %c0_i32 = arith.constant 0 : i32
    %c0_i32_0 = arith.constant 0 : i32
    %c0_i32_1 = arith.constant 0 : i32
    return %arg0, %c0_i32, %c0_i32_0 : i32, i32, i32
  }
  func.func @transform_2(%arg0: i32) -> (i32, i32) {
    %c0_i32 = arith.constant 0 : i32
    %c0_i32_0 = arith.constant 0 : i32
    %c0_i32_1 = arith.constant 0 : i32
    return %c0_i32, %c0_i32_0 : i32, i32
  }
  func.func @transform_3(%arg0: i32) -> (i32, i32) {
    %c0_i32 = arith.constant 0 : i32
    %c0_i32_0 = arith.constant 0 : i32
    %c0_i32_1 = arith.constant 0 : i32
    return %c0_i32, %c0_i32_0 : i32, i32
  }
  func.func @transform_4(%arg0: i32) -> (i32, i32) {
    %c0_i32 = arith.constant 0 : i32
    %c0_i32_0 = arith.constant 0 : i32
    %c0_i32_1 = arith.constant 0 : i32
    return %c0_i32, %c0_i32_0 : i32, i32
  }
  func.func @transform_5(%arg0: i32) -> (i32, i32) {
    %c0_i32 = arith.constant 0 : i32
    %c0_i32_0 = arith.constant 0 : i32
    %c0_i32_1 = arith.constant 0 : i32
    return %c0_i32, %c0_i32_0 : i32, i32
  }
  func.func @transform_6(%arg0: i32) -> (i32, i32) {
    %c0_i32 = arith.constant 0 : i32
    %c0_i32_0 = arith.constant 0 : i32
    %c0_i32_1 = arith.constant 0 : i32
    return %c0_i32, %c0_i32_0 : i32, i32
  }
  func.func @transform_7(%arg0: i32) -> (i32, i32) {
    %c0_i32 = arith.constant 0 : i32
    %c0_i32_0 = arith.constant 0 : i32
    %c0_i32_1 = arith.constant 0 : i32
    return %c0_i32, %c0_i32_0 : i32, i32
  }
  func.func @transform_8(%arg0: i32) -> (i32, i32) {
    %c0_i32 = arith.constant 0 : i32
    %c0_i32_0 = arith.constant 0 : i32
    %c0_i32_1 = arith.constant 0 : i32
    return %c0_i32, %c0_i32_0 : i32, i32
  }
  func.func @transform_9(%arg0: i32) -> (i32, i32) {
    %c0_i32 = arith.constant 0 : i32
    %c0_i32_0 = arith.constant 0 : i32
    %c0_i32_1 = arith.constant 0 : i32
    return %c0_i32, %c0_i32_0 : i32, i32
  }
  func.func @transform_10(%arg0: i32) -> (i32, i32, i32) {
    %c0_i32 = arith.constant 0 : i32
    %c0_i32_0 = arith.constant 0 : i32
    %c0_i32_1 = arith.constant 0 : i32
    return %arg0, %c0_i32, %c0_i32_0 : i32, i32, i32
  }
}

</mosaic_0001>

<llo_original>
// kernel: tpu_custom_call.1
$region0: #{tpu_custom_call.1}
  #allocation0 [shape = 'u32[]', space=smem, size = 0x4, offset = 0x4, fixed_abs, tag = 'smem constant byte address 0x4 - core index']
  #allocation1 [shape = 'u32[144,128]{1,0:T(1,128)}', space=vmem, size = 0x12000, scoped, tag = 'internal scratch']
  %s0 = inlined_call_operand.vmem [shape: f32[2,96,64], index: 0, kind: input, shape index: {}]
  %s1 = inlined_call_operand.vmem [shape: f32[2,1,32], index: 1, kind: input, shape index: {}]
  %s2 = inlined_call_operand.vmem [shape: bf16[48,96], index: 2, kind: input, shape index: {}]
  %s3 = inlined_call_operand.vmem [shape: f32[48,1], index: 3, kind: input, shape index: {}]
  %s4 = inlined_call_operand.vmem [shape: f32[32,64], index: 4, kind: input, shape index: {}]
  %s5 = inlined_call_operand.vmem [shape: f32[1,64], index: 5, kind: input, shape index: {}]
  %s6 = inlined_call_operand.vmem [shape: f32[16,32], index: 6, kind: input, shape index: {}]
  %s7 = inlined_call_operand.vmem [shape: f32[1,32], index: 7, kind: input, shape index: {}]
  %s8 = inlined_call_operand.vmem [shape: f32[64,64], index: 8, kind: input, shape index: {}]
  %s9 = inlined_call_operand.vmem [shape: f32[1,64], index: 9, kind: input, shape index: {}]
  %s10 = inlined_call_operand.hbm [shape: f32[2,1,64], index: 10, kind: output, shape index: {}]
  %s11 = sld [smem:[#allocation0]]
  $region50: #{tpu_custom_call.1} parent=0
    _
  %s13 = ssub.s32 1, %s11
  %s14 = scalar_select 0, %s13, %s11
  $region1: #{tpu_custom_call.1} parent=0
    #allocation2 [shape = 'u8[1024]{0}', space=vmem, size = 0x400, scoped, tag = 'output window, operand 0, single buffered']
    #allocation3 [shape = 's32[1]{0}', space=sflag, size = 0x4, scoped, tag = 'scoped memory for tpu_custom_call.1']
    %15 = vsyncpa [#allocation3], 0
    // Predicated region
    $region2: #{tpu_custom_call.1} parent=1 // pred_check
      _
    $region3: #{tpu_custom_call.1} parent=1 // pred_check_branch
      %17 = sbr.rel (0) target = $region5
    $region4: #{tpu_custom_call.1} parent=1 // pred_region
      _
    $region5: #{tpu_custom_call.1} parent=1 // pred_fallthru
      _
    // Predicated region
    $region6: #{tpu_custom_call.1} parent=1 // pred_check
      _
    $region7: #{tpu_custom_call.1} parent=1 // pred_check_branch
      %19 = sbr.rel (0) target = $region9
    $region8: #{tpu_custom_call.1} parent=1 // pred_region
      _
    $region9: #{tpu_custom_call.1} parent=1 // pred_fallthru
      _
    // Predicated region
    $region10: #{tpu_custom_call.1} parent=1 // pred_check
      _
    $region11: #{tpu_custom_call.1} parent=1 // pred_check_branch
      %21 = sbr.rel (0) target = $region13
    $region12: #{tpu_custom_call.1} parent=1 // pred_region
      _
    $region13: #{tpu_custom_call.1} parent=1 // pred_fallthru
      _
    // Predicated region
    $region14: #{tpu_custom_call.1} parent=1 // pred_check
      _
    $region15: #{tpu_custom_call.1} parent=1 // pred_check_branch
      %23 = sbr.rel (0) target = $region17
    $region16: #{tpu_custom_call.1} parent=1 // pred_region
      _
    $region17: #{tpu_custom_call.1} parent=1 // pred_fallthru
      _
    // Predicated region
    $region18: #{tpu_custom_call.1} parent=1 // pred_check
      _
    $region19: #{tpu_custom_call.1} parent=1 // pred_check_branch
      %25 = sbr.rel (0) target = $region21
    $region20: #{tpu_custom_call.1} parent=1 // pred_region
      _
    $region21: #{tpu_custom_call.1} parent=1 // pred_fallthru
      _
    // Predicated region
    $region22: #{tpu_custom_call.1} parent=1 // pred_check
      _
    $region23: #{tpu_custom_call.1} parent=1 // pred_check_branch
      %27 = sbr.rel (0) target = $region25
    $region24: #{tpu_custom_call.1} parent=1 // pred_region
      _
    $region25: #{tpu_custom_call.1} parent=1 // pred_fallthru
      _
    // Predicated region
    $region26: #{tpu_custom_call.1} parent=1 // pred_check
      _
    $region27: #{tpu_custom_call.1} parent=1 // pred_check_branch
      %29 = sbr.rel (0) target = $region29
    $region28: #{tpu_custom_call.1} parent=1 // pred_region
      _
    $region29: #{tpu_custom_call.1} parent=1 // pred_fallthru
      _
    // Predicated region
    $region30: #{tpu_custom_call.1} parent=1 // pred_check
      _
    $region31: #{tpu_custom_call.1} parent=1 // pred_check_branch
      %31 = sbr.rel (0) target = $region33
    $region32: #{tpu_custom_call.1} parent=1 // pred_region
      _
    $region33: #{tpu_custom_call.1} parent=1 // pred_fallthru
      _
    // Predicated region
    $region34: #{tpu_custom_call.1} parent=1 // pred_check
      _
    $region35: #{tpu_custom_call.1} parent=1 // pred_check_branch
      %33 = sbr.rel (0) target = $region37
    $region36: #{tpu_custom_call.1} parent=1 // pred_region
      _
    $region37: #{tpu_custom_call.1} parent=1 // pred_fallthru
      _
    // Predicated region
    $region38: #{tpu_custom_call.1} parent=1 // pred_check
      _
    $region39: #{tpu_custom_call.1} parent=1 // pred_check_branch
      %35 = sbr.rel (0) target = $region41
    $region40: #{tpu_custom_call.1} parent=1 // pred_region
      _
    $region41: #{tpu_custom_call.1} parent=1 // pred_fallthru
      _
    %v37 = vld [vmem:[%s0] sm:$0xff]
    %v38 = vld [vmem:[%s0 + $0x8] sm:$0xff]
    %v39 = vld [vmem:[%s0 + $0x10] sm:$0xff]
    %v40 = vld [vmem:[%s0 + $0x18] sm:$0xff]
    %v41 = vld [vmem:[%s0 + $0x20] sm:$0xff]
    %v42 = vld [vmem:[%s0 + $0x28] sm:$0xff]
    %v43 = vld [vmem:[%s0 + $0x30] sm:$0xff]
    %v44 = vld [vmem:[%s0 + $0x38] sm:$0xff]
    %v45 = vld [vmem:[%s0 + $0x40] sm:$0xff]
    %v46 = vld [vmem:[%s0 + $0x48] sm:$0xff]
    %v47 = vld [vmem:[%s0 + $0x50] sm:$0xff]
    %v48 = vld [vmem:[%s0 + $0x58] sm:$0xff]
    %v49 = vld [vmem:[%s0 + $0x60] sm:$0xff]
    %v50 = vld [vmem:[%s0 + $0x68] sm:$0xff]
    %v51 = vld [vmem:[%s0 + $0x70] sm:$0xff]
    %v52 = vld [vmem:[%s0 + $0x78] sm:$0xff]
    %v53 = vld [vmem:[%s0 + $0x80] sm:$0xff]
    %v54 = vld [vmem:[%s0 + $0x88] sm:$0xff]
    %v55 = vld [vmem:[%s0 + $0x90] sm:$0xff]
    %v56 = vld [vmem:[%s0 + $0x98] sm:$0xff]
    %v57 = vld [vmem:[%s0 + $0xa0] sm:$0xff]
    %v58 = vld [vmem:[%s0 + $0xa8] sm:$0xff]
    %v59 = vld [vmem:[%s0 + $0xb0] sm:$0xff]
    %v60 = vld [vmem:[%s0 + $0xb8] sm:$0xff]
    %v61 = vpack.c.bf16 %v38, %v37
    %v62 = vpack.c.bf16 %v40, %v39
    %v63 = vpack.c.bf16 %v42, %v41
    %v64 = vpack.c.bf16 %v44, %v43
    %v65 = vpack.c.bf16 %v46, %v45
    %v66 = vpack.c.bf16 %v48, %v47
    %v67 = vpack.c.bf16 %v50, %v49
    %v68 = vpack.c.bf16 %v52, %v51
    %v69 = vpack.c.bf16 %v54, %v53
    %v70 = vpack.c.bf16 %v56, %v55
    %v71 = vpack.c.bf16 %v58, %v57
    %v72 = vpack.c.bf16 %v60, %v59
    %v73 = vld [vmem:[%s2] sm:$0xf]
    %v74 = vld [vmem:[%s2 + $0x4] sm:$0xf]
    %v75 = vld [vmem:[%s2 + $0x8] sm:$0xf]
    %v76 = vld [vmem:[%s2 + $0xc] sm:$0xf]
    %v77 = vld [vmem:[%s2 + $0x10] sm:$0xf]
    %v78 = vld [vmem:[%s2 + $0x14] sm:$0xf]
    %v79 = vld [vmem:[%s3] sm:$0xff]
    %v80 = vld [vmem:[%s3 + $0x8] sm:$0xff]
    %v81 = vld [vmem:[%s3 + $0x10] sm:$0xff]
    %v82 = vld [vmem:[%s3 + $0x18] sm:$0xff]
    %v83 = vld [vmem:[%s3 + $0x20] sm:$0xff]
    %v84 = vld [vmem:[%s3 + $0x28] sm:$0xff]
    %86 = vset.pattern.permute.xlu0 0
    %87 = vperm.xlu0 %86, %v79
    %v88 = vpop.permute.xlu0 %87
    %91 = vset.pattern.permute.xlu0 0
    %92 = vperm.xlu0 %91, %v80
    %v93 = vpop.permute.xlu0 %92
    %96 = vset.pattern.permute.xlu0 0
    %97 = vperm.xlu0 %96, %v81
    %v98 = vpop.permute.xlu0 %97
    %101 = vset.pattern.permute.xlu0 0
    %102 = vperm.xlu0 %101, %v82
    %v103 = vpop.permute.xlu0 %102
    %106 = vset.pattern.permute.xlu0 0
    %107 = vperm.xlu0 %106, %v83
    %v108 = vpop.permute.xlu0 %107
    %111 = vset.pattern.permute.xlu0 0
    %112 = vperm.xlu0 %111, %v84
    %v113 = vpop.permute.xlu0 %112
    %v121 = vunpack.c.l.b16 %v73
    %v122 = vunpack.c.l.b16 %v74
    %v123 = vunpack.c.l.b16 %v75
    %v124 = vunpack.c.l.b16 %v76
    %v125 = vunpack.c.l.b16 %v77
    %v126 = vunpack.c.l.b16 %v78
    %v127 = vpack.c.b16 %v122, %v121
    %v128 = vpack.c.b16 %v124, %v123
    %v129 = vpack.c.b16 %v126, %v125
    %vm130 = vcmask 785408
    %v132 = vsel %vm130, %v127, 0
    %v135 = vsel %vm130, %v128, 0
    %v138 = vsel %vm130, %v129, 0
    %140 = vmatprep.subr.bf16.mxu0 0
    %141 = vmatpush1.bf16.msra.mxu0 %v61
    %142 = vmatprep.subr.bf16.mxu0 0
    %143 = vmatpush1.bf16.msra.mxu0 %v62
    %144 = vmatprep.subr.bf16.mxu0 0
    %145 = vmatpush1.bf16.msra.mxu0 %v63
    %146 = vmatprep.subr.bf16.mxu0 0
    %147 = vmatpush1.bf16.msra.mxu0 %v64
    %148 = vmatprep.subr.bf16.mxu0 0
    %149 = vmatpush1.bf16.msra.mxu0 %v65
    %150 = vmatprep.subr.bf16.mxu0 0
    %151 = vmatpush1.bf16.msra.mxu0 %v66
    %152 = vmatprep.subr.bf16.mxu0 0
    %153 = vmatpush1.bf16.msra.mxu0 0
    %154 = vmatprep.subr.bf16.mxu0 0
    %155 = vmatpush1.bf16.msra.mxu0 0
    %156 = vmatprep.subr.bf16.mxu0 0
    %157 = vmatpush1.bf16.msra.mxu0 0
    %158 = vmatprep.subr.bf16.mxu0 0
    %159 = vmatpush1.bf16.msra.mxu0 0
    %160 = vmatprep.subr.bf16.mxu0 0
    %161 = vmatpush1.bf16.msra.mxu0 0
    %162 = vmatprep.subr.bf16.mxu0 0
    %163 = vmatpush1.bf16.msra.mxu0 0
    %164 = vmatprep.subr.bf16.mxu0 0
    %165 = vmatpush1.bf16.msra.mxu0 0
    %166 = vmatprep.subr.bf16.mxu0 0
    %167 = vmatpush1.bf16.msra.mxu0 0
    %168 = vmatprep.subr.bf16.mxu0 0
    %169 = vmatpush1.bf16.msra.mxu0 0
    %170 = vmatprep.subr.bf16.mxu0 0
    %171 = vmatpush1.bf16.msra.mxu0 0
    %172 = vmatprep.mubr.bf16.mxu0 0
    %173 = vmatmul.mubr.bf16.gmra.mrb[0].mxu0 %v132
    %v174 = vpop.f32.mrb[0].mxu0
    %v175 = vadd.f32 %v88, %v174
    %v176 = vpop.f32.mrb[0].mxu0
    %v177 = vpop.f32.mrb[0].mxu0
    %v178 = vadd.f32 %v93, %v177
    %v179 = vpop.f32.mrb[0].mxu0
    %180 = vmatprep.mubr.bf16.mxu0 0
    %181 = vmatmul.mubr.bf16.gmra.mrb[0].mxu0 %v135
    %v182 = vpop.f32.mrb[0].mxu0
    %v183 = vadd.f32 %v98, %v182
    %v184 = vpop.f32.mrb[0].mxu0
    %v185 = vpop.f32.mrb[0].mxu0
    %v186 = vadd.f32 %v103, %v185
    %v187 = vpop.f32.mrb[0].mxu0
    %188 = vmatprep.mubr.bf16.mxu0 0
    %189 = vmatmul.mubr.bf16.gmra.mrb[0].mxu0 %v138
    %v190 = vpop.f32.mrb[0].mxu0
    %v191 = vadd.f32 %v108, %v190
    %v192 = vpop.f32.mrb[0].mxu0
    %v193 = vpop.f32.mrb[0].mxu0
    %v194 = vadd.f32 %v113, %v193
    %v195 = vpop.f32.mrb[0].mxu0
    %196 = vdwg.mxu0
    %197 = vmatprep.subr.bf16.mxu0 0
    %198 = vmatpush1.bf16.msra.mxu0 %v67
    %199 = vmatprep.subr.bf16.mxu0 0
    %200 = vmatpush1.bf16.msra.mxu0 %v68
    %201 = vmatprep.subr.bf16.mxu0 0
    %202 = vmatpush1.bf16.msra.mxu0 %v69
    %203 = vmatprep.subr.bf16.mxu0 0
    %204 = vmatpush1.bf16.msra.mxu0 %v70
    %205 = vmatprep.subr.bf16.mxu0 0
    %206 = vmatpush1.bf16.msra.mxu0 %v71
    %207 = vmatprep.subr.bf16.mxu0 0
    %208 = vmatpush1.bf16.msra.mxu0 %v72
    %209 = vmatprep.subr.bf16.mxu0 0
    %210 = vmatpush1.bf16.msra.mxu0 0
    %211 = vmatprep.subr.bf16.mxu0 0
    %212 = vmatpush1.bf16.msra.mxu0 0
    %213 = vmatprep.subr.bf16.mxu0 0
    %214 = vmatpush1.bf16.msra.mxu0 0
    %215 = vmatprep.subr.bf16.mxu0 0
    %216 = vmatpush1.bf16.msra.mxu0 0
    %217 = vmatprep.subr.bf16.mxu0 0
    %218 = vmatpush1.bf16.msra.mxu0 0
    %219 = vmatprep.subr.bf16.mxu0 0
    %220 = vmatpush1.bf16.msra.mxu0 0
    %221 = vmatprep.subr.bf16.mxu0 0
    %222 = vmatpush1.bf16.msra.mxu0 0
    %223 = vmatprep.subr.bf16.mxu0 0
    %224 = vmatpush1.bf16.msra.mxu0 0
    %225 = vmatprep.subr.bf16.mxu0 0
    %226 = vmatpush1.bf16.msra.mxu0 0
    %227 = vmatprep.subr.bf16.mxu0 0
    %228 = vmatpush1.bf16.msra.mxu0 0
    %229 = vmatprep.mubr.bf16.mxu0 0
    %230 = vmatmul.mubr.bf16.gmra.mrb[0].mxu0 %v132
    %v231 = vpop.f32.mrb[0].mxu0
    %v232 = vadd.f32 %v88, %v231
    %v233 = vpop.f32.mrb[0].mxu0
    %v234 = vpop.f32.mrb[0].mxu0
    %v235 = vadd.f32 %v93, %v234
    %v236 = vpop.f32.mrb[0].mxu0
    %237 = vmatprep.mubr.bf16.mxu0 0
    %238 = vmatmul.mubr.bf16.gmra.mrb[0].mxu0 %v135
    %v239 = vpop.f32.mrb[0].mxu0
    %v240 = vadd.f32 %v98, %v239
    %v241 = vpop.f32.mrb[0].mxu0
    %v242 = vpop.f32.mrb[0].mxu0
    %v243 = vadd.f32 %v103, %v242
    %v244 = vpop.f32.mrb[0].mxu0
    %245 = vmatprep.mubr.bf16.mxu0 0
    %246 = vmatmul.mubr.bf16.gmra.mrb[0].mxu0 %v138
    %v247 = vpop.f32.mrb[0].mxu0
    %v248 = vadd.f32 %v108, %v247
    %v249 = vpop.f32.mrb[0].mxu0
    %v250 = vpop.f32.mrb[0].mxu0
    %v251 = vadd.f32 %v113, %v250
    %v252 = vpop.f32.mrb[0].mxu0
    %253 = vdwg.mxu0
    %v254 = vmax.f32 %v175, 0.0
    %v255 = vmax.f32 %v178, 0.0
    %v256 = vmax.f32 %v183, 0.0
    %v257 = vmax.f32 %v186, 0.0
    %v258 = vmax.f32 %v191, 0.0
    %v259 = vmax.f32 %v194, 0.0
    %v260 = vmax.f32 %v232, 0.0
    %v261 = vmax.f32 %v235, 0.0
    %v262 = vmax.f32 %v240, 0.0
    %v263 = vmax.f32 %v243, 0.0
    %v264 = vmax.f32 %v248, 0.0
    %v265 = vmax.f32 %v251, 0.0
    %vm266 = vcmask 523264
    %v267 = vsel %vm266, %v254, 0.0
    %268 = vadd.xlane.f32.xlu0 %v267
    %v269 = vpop.xlane.xlu0 %268
    %v270 = vsel %vm266, %v255, 0.0
    %271 = vadd.xlane.f32.xlu0 %v270
    %v272 = vpop.xlane.xlu0 %271
    %v273 = vsel %vm266, %v256, 0.0
    %274 = vadd.xlane.f32.xlu0 %v273
    %v275 = vpop.xlane.xlu0 %274
    %v276 = vsel %vm266, %v257, 0.0
    %277 = vadd.xlane.f32.xlu0 %v276
    %v278 = vpop.xlane.xlu0 %277
    %v279 = vsel %vm266, %v258, 0.0
    %280 = vadd.xlane.f32.xlu0 %v279
    %v281 = vpop.xlane.xlu0 %280
    %v282 = vsel %vm266, %v259, 0.0
    %283 = vadd.xlane.f32.xlu0 %v282
    %v284 = vpop.xlane.xlu0 %283
    %v285 = vsel %vm266, %v260, 0.0
    %286 = vadd.xlane.f32.xlu0 %v285
    %v287 = vpop.xlane.xlu0 %286
    %v288 = vsel %vm266, %v261, 0.0
    %289 = vadd.xlane.f32.xlu0 %v288
    %v290 = vpop.xlane.xlu0 %289
    %v291 = vsel %vm266, %v262, 0.0
    %292 = vadd.xlane.f32.xlu0 %v291
    %v293 = vpop.xlane.xlu0 %292
    %v294 = vsel %vm266, %v263, 0.0
    %295 = vadd.xlane.f32.xlu0 %v294
    %v296 = vpop.xlane.xlu0 %295
    %v297 = vsel %vm266, %v264, 0.0
    %298 = vadd.xlane.f32.xlu0 %v297
    %v299 = vpop.xlane.xlu0 %298
    %v300 = vsel %vm266, %v265, 0.0
    %301 = vadd.xlane.f32.xlu0 %v300
    %v302 = vpop.xlane.xlu0 %301
    %v303 = vrcp.pop 64.0
    %v304 = vmul.f32 %v269, %v303
    %v305 = vmul.f32 %v272, %v303
    %v306 = vmul.f32 %v275, %v303
    %v307 = vmul.f32 %v278, %v303
    %v308 = vmul.f32 %v281, %v303
    %v309 = vmul.f32 %v284, %v303
    %v310 = vmul.f32 %v287, %v303
    %v311 = vmul.f32 %v290, %v303
    %v312 = vmul.f32 %v293, %v303
    %v313 = vmul.f32 %v296, %v303
    %v314 = vmul.f32 %v299, %v303
    %v315 = vmul.f32 %v302, %v303
    %v316 = vld [vmem:[%s1] sm:$0x1]
    %v317 = vld [vmem:[%s1 + $0x1] sm:$0x1]
    %v318 = vld [vmem:[%s4] sm:$0xff]
    %v319 = vld [vmem:[%s4 + $0x8] sm:$0xff]
    %v320 = vld [vmem:[%s4 + $0x10] sm:$0xff]
    %v321 = vld [vmem:[%s4 + $0x18] sm:$0xff]
    %v322 = vld [vmem:[%s5] sm:$0x1]
    %v324 = vlaneseq
    %v325 = vshrl.u32 %v324, 7
    %v326 = vsub.s32 0, %v325
    %v327 = vrot.slane %v322, %v326
    %v331 = vcombine.low %v316, %v317
    %v333 = vunpack.c.l.s4 1966171168
    %v334 = vunpack.c.0.s8 %v333
    %v335 = vlaneseq
    %v336 = vshrl.u32 %v335, 7
    %v337 = vsub.s32 %v334, %v336
    %v338 = vrot.slane %v331, %v337
    %v340 = vunpack.c.l.s4 1966171168
    %v341 = vunpack.c.0.s8 %v340
    %v342 = vlaneseq
    %v343 = vshrl.u32 %v342, 7
    %v344 = vsub.s32 %v341, %v343
    %v345 = vrot.slane %v338, %v344
    %vm346 = vcmask 261120
    %v347 = vsel %vm346, %v345, 0
    %349 = vmatprep.subr.mxu0 0.0
    %350 = vmatpush1.msra.mxu0 %v318
    %351 = vmatprep.subr.mxu0 0.0
    %352 = vmatpush1.msra.mxu0 %v319
    %353 = vmatprep.subr.mxu0 0.0
    %354 = vmatpush1.msra.mxu0 %v320
    %355 = vmatprep.subr.mxu0 0.0
    %356 = vmatpush1.msra.mxu0 %v321
    %357 = vmatprep.subr.mxu0 0.0
    %358 = vmatpush1.msra.mxu0 0.0
    %359 = vmatprep.subr.mxu0 0.0
    %360 = vmatpush1.msra.mxu0 0.0
    %361 = vmatprep.subr.mxu0 0.0
    %362 = vmatpush1.msra.mxu0 0.0
    %363 = vmatprep.subr.mxu0 0.0
    %364 = vmatpush1.msra.mxu0 0.0
    %365 = vmatprep.subr.mxu0 0.0
    %366 = vmatpush1.msra.mxu0 0.0
    %367 = vmatprep.subr.mxu0 0.0
    %368 = vmatpush1.msra.mxu0 0.0
    %369 = vmatprep.subr.mxu0 0.0
    %370 = vmatpush1.msra.mxu0 0.0
    %371 = vmatprep.subr.mxu0 0.0
    %372 = vmatpush1.msra.mxu0 0.0
    %373 = vmatprep.subr.mxu0 0.0
    %374 = vmatpush1.msra.mxu0 0.0
    %375 = vmatprep.subr.mxu0 0.0
    %376 = vmatpush1.msra.mxu0 0.0
    %377 = vmatprep.subr.mxu0 0.0
    %378 = vmatpush1.msra.mxu0 0.0
    %379 = vmatprep.subr.mxu0 0.0
    %380 = vmatpush1.msra.mxu0 0.0
    %381 = vmatprep.subr.mxu0 0.0
    %382 = vmatpush1.msra.mxu0 0.0
    %383 = vmatprep.subr.mxu0 0.0
    %384 = vmatpush1.msra.mxu0 0.0
    %385 = vmatprep.subr.mxu0 0.0
    %386 = vmatpush1.msra.mxu0 0.0
    %387 = vmatprep.subr.mxu0 0.0
    %388 = vmatpush1.msra.mxu0 0.0
    %389 = vmatprep.subr.mxu0 0.0
    %390 = vmatpush1.msra.mxu0 0.0
    %391 = vmatprep.subr.mxu0 0.0
    %392 = vmatpush1.msra.mxu0 0.0
    %393 = vmatprep.subr.mxu0 0.0
    %394 = vmatpush1.msra.mxu0 0.0
    %395 = vmatprep.subr.mxu0 0.0
    %396 = vmatpush1.msra.mxu0 0.0
    %397 = vmatprep.subr.mxu0 0.0
    %398 = vmatpush1.msra.mxu0 0.0
    %399 = vmatprep.subr.mxu0 0.0
    %400 = vmatpush1.msra.mxu0 0.0
    %401 = vmatprep.subr.mxu0 0.0
    %402 = vmatpush1.msra.mxu0 0.0
    %403 = vmatprep.subr.mxu0 0.0
    %404 = vmatpush1.msra.mxu0 0.0
    %405 = vmatprep.subr.mxu0 0.0
    %406 = vmatpush1.msra.mxu0 0.0
    %407 = vmatprep.subr.mxu0 0.0
    %408 = vmatpush1.msra.mxu0 0.0
    %409 = vmatprep.subr.mxu0 0.0
    %410 = vmatpush1.msra.mxu0 0.0
    %411 = vmatprep.subr.mxu0 0.0
    %412 = vmatpush1.msra.mxu0 0.0
    %413 = vmatprep.mubr.f32.mxu0 0.0
    %414 = vmatmul.mubr.f32.gmra.mrb[0].mxu0 %v347
    %v415 = vpop.f32.mrb[0].mxu0
    %v416 = vadd.f32 %v327, %v415
    %v417 = vpop.f32.mrb[0].mxu0
    %418 = vdwg.mxu0
    %v419 = vadd.f32 %v416, 1.0
    %v421 = vlaneseq
    %v422 = vshrl.u32 %v421, 7
    %v423 = vsub.s32 0, %v422
    %v424 = vrot.slane %v419, %v423
    %426 = vbcast.lane.b32.xlu0 %v424, 256
    %v427 = vpop.permute.xlu0 %426
    %s429 = sor.u32 256, 8
    %430 = vbcast.lane.b32.xlu0 %v424, %s429
    %v431 = vpop.permute.xlu0 %430
    %s433 = sor.u32 256, 16
    %434 = vbcast.lane.b32.xlu0 %v424, %s433
    %v435 = vpop.permute.xlu0 %434
    %s437 = sor.u32 256, 24
    %438 = vbcast.lane.b32.xlu0 %v424, %s437
    %v439 = vpop.permute.xlu0 %438
    %v440 = vlaneseq
    %v441 = vshrl.u32 %v440, 7
    %v442 = vsub.s32 1, %v441
    %v443 = vrot.slane %v419, %v442
    %445 = vbcast.lane.b32.xlu0 %v443, 256
    %v446 = vpop.permute.xlu0 %445
    %s448 = sor.u32 256, 8
    %449 = vbcast.lane.b32.xlu0 %v443, %s448
    %v450 = vpop.permute.xlu0 %449
    %s452 = sor.u32 256, 16
    %453 = vbcast.lane.b32.xlu0 %v443, %s452
    %v454 = vpop.permute.xlu0 %453
    %s456 = sor.u32 256, 24
    %457 = vbcast.lane.b32.xlu0 %v443, %s456
    %v458 = vpop.permute.xlu0 %457
    %v467 = vmul.f32 %v304, %v427
    %v468 = vmul.f32 %v305, %v431
    %v469 = vmul.f32 %v306, %v435
    %v470 = vmul.f32 %v307, %v439
    %v471 = vmul.f32 %v310, %v446
    %v472 = vmul.f32 %v311, %v450
    %v473 = vmul.f32 %v312, %v454
    %v474 = vmul.f32 %v313, %v458
    %v475 = vld [vmem:[%s6] sm:$0xff]
    %v476 = vld [vmem:[%s6 + $0x8] sm:$0xff]
    %v477 = vld [vmem:[%s7] sm:$0x1]
    %v479 = vlaneseq
    %v480 = vshrl.u32 %v479, 7
    %v481 = vsub.s32 0, %v480
    %v482 = vrot.slane %v477, %v481
    %v488 = vlaneseq
    %v489 = vand.u32 %v488, 127
    %v490 = vlaneseq
    %v491 = vshrl.u32 %v490, 7
    %v492 = vsub.s32 %v489, %v491
    %v493 = vrot.slane %v308, %v492
    %v494 = vadd.s32 %v489, 4294967288
    %v495 = vlaneseq
    %v496 = vshrl.u32 %v495, 7
    %v497 = vsub.s32 %v494, %v496
    %v498 = vrot.slane %v309, %v497
    %vm499 = vcmask 130112
    %v500 = vsel %vm499, %v498, %v493
    %v501 = vlaneseq
    %v502 = vshrl.u32 %v501, 7
    %v503 = vsub.s32 %v489, %v502
    %v504 = vrot.slane %v314, %v503
    %v505 = vlaneseq
    %v506 = vshrl.u32 %v505, 7
    %v507 = vsub.s32 %v494, %v506
    %v508 = vrot.slane %v315, %v507
    %v509 = vsel %vm499, %v508, %v504
    %vm510 = vcmask 1041409
    %v511 = vsel %vm510, %v509, %v500
    %vm512 = vcmask 130048
    %v513 = vsel %vm512, %v511, 0
    %515 = vmatprep.subr.mxu0 0.0
    %516 = vmatpush1.msra.mxu0 %v475
    %517 = vmatprep.subr.mxu0 0.0
    %518 = vmatpush1.msra.mxu0 %v476
    %519 = vmatprep.subr.mxu0 0.0
    %520 = vmatpush1.msra.mxu0 0.0
    %521 = vmatprep.subr.mxu0 0.0
    %522 = vmatpush1.msra.mxu0 0.0
    %523 = vmatprep.subr.mxu0 0.0
    %524 = vmatpush1.msra.mxu0 0.0
    %525 = vmatprep.subr.mxu0 0.0
    %526 = vmatpush1.msra.mxu0 0.0
    %527 = vmatprep.subr.mxu0 0.0
    %528 = vmatpush1.msra.mxu0 0.0
    %529 = vmatprep.subr.mxu0 0.0
    %530 = vmatpush1.msra.mxu0 0.0
    %531 = vmatprep.subr.mxu0 0.0
    %532 = vmatpush1.msra.mxu0 0.0
    %533 = vmatprep.subr.mxu0 0.0
    %534 = vmatpush1.msra.mxu0 0.0
    %535 = vmatprep.subr.mxu0 0.0
    %536 = vmatpush1.msra.mxu0 0.0
    %537 = vmatprep.subr.mxu0 0.0
    %538 = vmatpush1.msra.mxu0 0.0
    %539 = vmatprep.subr.mxu0 0.0
    %540 = vmatpush1.msra.mxu0 0.0
    %541 = vmatprep.subr.mxu0 0.0
    %542 = vmatpush1.msra.mxu0 0.0
    %543 = vmatprep.subr.mxu0 0.0
    %544 = vmatpush1.msra.mxu0 0.0
    %545 = vmatprep.subr.mxu0 0.0
    %546 = vmatpush1.msra.mxu0 0.0
    %547 = vmatprep.subr.mxu0 0.0
    %548 = vmatpush1.msra.mxu0 0.0
    %549 = vmatprep.subr.mxu0 0.0
    %550 = vmatpush1.msra.mxu0 0.0
    %551 = vmatprep.subr.mxu0 0.0
    %552 = vmatpush1.msra.mxu0 0.0
    %553 = vmatprep.subr.mxu0 0.0
    %554 = vmatpush1.msra.mxu0 0.0
    %555 = vmatprep.subr.mxu0 0.0
    %556 = vmatpush1.msra.mxu0 0.0
    %557 = vmatprep.subr.mxu0 0.0
    %558 = vmatpush1.msra.mxu0 0.0
    %559 = vmatprep.subr.mxu0 0.0
    %560 = vmatpush1.msra.mxu0 0.0
    %561 = vmatprep.subr.mxu0 0.0
    %562 = vmatpush1.msra.mxu0 0.0
    %563 = vmatprep.subr.mxu0 0.0
    %564 = vmatpush1.msra.mxu0 0.0
    %565 = vmatprep.subr.mxu0 0.0
    %566 = vmatpush1.msra.mxu0 0.0
    %567 = vmatprep.subr.mxu0 0.0
    %568 = vmatpush1.msra.mxu0 0.0
    %569 = vmatprep.subr.mxu0 0.0
    %570 = vmatpush1.msra.mxu0 0.0
    %571 = vmatprep.subr.mxu0 0.0
    %572 = vmatpush1.msra.mxu0 0.0
    %573 = vmatprep.subr.mxu0 0.0
    %574 = vmatpush1.msra.mxu0 0.0
    %575 = vmatprep.subr.mxu0 0.0
    %576 = vmatpush1.msra.mxu0 0.0
    %577 = vmatprep.subr.mxu0 0.0
    %578 = vmatpush1.msra.mxu0 0.0
    %579 = vmatprep.mubr.f32.mxu0 0.0
    %580 = vmatmul.mubr.f32.gmra.mrb[0].mxu0 %v513
    %v581 = vpop.f32.mrb[0].mxu0
    %v582 = vadd.f32 %v482, %v581
    %v583 = vpop.f32.mrb[0].mxu0
    %584 = vdwg.mxu0
    %v585 = vxor.u32 %v582, 2147483648
    %v586 = vmul.f32 %v585, 1.442695
    %v587 = vpow.pop %v586
    %v588 = vadd.f32 %v587, 1.0
    %v589 = vrcp.pop %v588
    %v590 = vmul.f32 1.0, %v589
    %v591 = vadd.f32 %v590, 1.0
    %593 = vrot.lane.b32.xlu0 %v591, 32
    %v594 = vpop.permute.xlu0 %593
    %v596 = vmul.f32 %v416, %v594
    %605 = vset.pattern.permute.xlu0 0
    %606 = vperm.xlu0 %605, %v467
    %v607 = vpop.permute.xlu0 %606
    %608 = vset.pattern.permute.xlu0 0
    %609 = vperm.xlu0 %608, %v468
    %v610 = vpop.permute.xlu0 %609
    %611 = vset.pattern.permute.xlu0 0
    %612 = vperm.xlu0 %611, %v469
    %v613 = vpop.permute.xlu0 %612
    %614 = vset.pattern.permute.xlu0 0
    %615 = vperm.xlu0 %614, %v470
    %v616 = vpop.permute.xlu0 %615
    %617 = vset.pattern.permute.xlu0 0
    %618 = vperm.xlu0 %617, %v471
    %v619 = vpop.permute.xlu0 %618
    %620 = vset.pattern.permute.xlu0 0
    %621 = vperm.xlu0 %620, %v472
    %v622 = vpop.permute.xlu0 %621
    %623 = vset.pattern.permute.xlu0 0
    %624 = vperm.xlu0 %623, %v473
    %v625 = vpop.permute.xlu0 %624
    %626 = vset.pattern.permute.xlu0 0
    %627 = vperm.xlu0 %626, %v474
    %v628 = vpop.permute.xlu0 %627
    %v629 = vlaneseq
    %v630 = vshrl.u32 %v629, 7
    %v631 = vsub.s32 %v489, %v630
    %v632 = vrot.slane %v607, %v631
    %v633 = vlaneseq
    %v634 = vshrl.u32 %v633, 7
    %v635 = vsub.s32 %v494, %v634
    %v636 = vrot.slane %v610, %v635
    %v637 = vsel %vm499, %v636, %v632
    %v638 = vadd.s32 %v489, 4294967280
    %v639 = vlaneseq
    %v640 = vshrl.u32 %v639, 7
    %v641 = vsub.s32 %v638, %v640
    %v642 = vrot.slane %v613, %v641
    %vm643 = vcmask 195712
    %v644 = vsel %vm643, %v642, %v637
    %v645 = vadd.s32 %v489, 4294967272
    %v646 = vlaneseq
    %v647 = vshrl.u32 %v646, 7
    %v648 = vsub.s32 %v645, %v647
    %v649 = vrot.slane %v616, %v648
    %vm650 = vcmask 261312
    %v651 = vsel %vm650, %v649, %v644
    %v652 = vlaneseq
    %v653 = vshrl.u32 %v652, 7
    %v654 = vsub.s32 %v489, %v653
    %v655 = vrot.slane %v619, %v654
    %v656 = vlaneseq
    %v657 = vshrl.u32 %v656, 7
    %v658 = vsub.s32 %v494, %v657
    %v659 = vrot.slane %v622, %v658
    %v660 = vsel %vm499, %v659, %v655
    %v661 = vlaneseq
    %v662 = vshrl.u32 %v661, 7
    %v663 = vsub.s32 %v638, %v662
    %v664 = vrot.slane %v625, %v663
    %v665 = vsel %vm643, %v664, %v660
    %v666 = vlaneseq
    %v667 = vshrl.u32 %v666, 7
    %v668 = vsub.s32 %v645, %v667
    %v669 = vrot.slane %v628, %v668
    %v670 = vsel %vm650, %v669, %v665
    %v671 = vsel %vm510, %v670, %v651
    %v673 = vsel %vm346, %v671, %v596
    %v674 = vld [vmem:[%s8] sm:$0xff]
    %v675 = vld [vmem:[%s8 + $0x8] sm:$0xff]
    %v676 = vld [vmem:[%s8 + $0x10] sm:$0xff]
    %v677 = vld [vmem:[%s8 + $0x18] sm:$0xff]
    %v678 = vld [vmem:[%s8 + $0x20] sm:$0xff]
    %v679 = vld [vmem:[%s8 + $0x28] sm:$0xff]
    %v680 = vld [vmem:[%s8 + $0x30] sm:$0xff]
    %v681 = vld [vmem:[%s8 + $0x38] sm:$0xff]
    %v683 = vsel %vm266, %v673, 0
    %685 = vmatprep.subr.mxu0 0.0
    %686 = vmatpush1.msra.mxu0 %v674
    %687 = vmatprep.subr.mxu0 0.0
    %688 = vmatpush1.msra.mxu0 %v675
    %689 = vmatprep.subr.mxu0 0.0
    %690 = vmatpush1.msra.mxu0 %v676
    %691 = vmatprep.subr.mxu0 0.0
    %692 = vmatpush1.msra.mxu0 %v677
    %693 = vmatprep.subr.mxu0 0.0
    %694 = vmatpush1.msra.mxu0 %v678
    %695 = vmatprep.subr.mxu0 0.0
    %696 = vmatpush1.msra.mxu0 %v679
    %697 = vmatprep.subr.mxu0 0.0
    %698 = vmatpush1.msra.mxu0 %v680
    %699 = vmatprep.subr.mxu0 0.0
    %700 = vmatpush1.msra.mxu0 %v681
    %701 = vmatprep.subr.mxu0 0.0
    %702 = vmatpush1.msra.mxu0 0.0
    %703 = vmatprep.subr.mxu0 0.0
    %704 = vmatpush1.msra.mxu0 0.0
    %705 = vmatprep.subr.mxu0 0.0
    %706 = vmatpush1.msra.mxu0 0.0
    %707 = vmatprep.subr.mxu0 0.0
    %708 = vmatpush1.msra.mxu0 0.0
    %709 = vmatprep.subr.mxu0 0.0
    %710 = vmatpush1.msra.mxu0 0.0
    %711 = vmatprep.subr.mxu0 0.0
    %712 = vmatpush1.msra.mxu0 0.0
    %713 = vmatprep.subr.mxu0 0.0
    %714 = vmatpush1.msra.mxu0 0.0
    %715 = vmatprep.subr.mxu0 0.0
    %716 = vmatpush1.msra.mxu0 0.0
    %717 = vmatprep.subr.mxu0 0.0
    %718 = vmatpush1.msra.mxu0 0.0
    %719 = vmatprep.subr.mxu0 0.0
    %720 = vmatpush1.msra.mxu0 0.0
    %721 = vmatprep.subr.mxu0 0.0
    %722 = vmatpush1.msra.mxu0 0.0
    %723 = vmatprep.subr.mxu0 0.0
    %724 = vmatpush1.msra.mxu0 0.0
    %725 = vmatprep.subr.mxu0 0.0
    %726 = vmatpush1.msra.mxu0 0.0
    %727 = vmatprep.subr.mxu0 0.0
    %728 = vmatpush1.msra.mxu0 0.0
    %729 = vmatprep.subr.mxu0 0.0
    %730 = vmatpush1.msra.mxu0 0.0
    %731 = vmatprep.subr.mxu0 0.0
    %732 = vmatpush1.msra.mxu0 0.0
    %733 = vmatprep.subr.mxu0 0.0
    %734 = vmatpush1.msra.mxu0 0.0
    %735 = vmatprep.subr.mxu0 0.0
    %736 = vmatpush1.msra.mxu0 0.0
    %737 = vmatprep.subr.mxu0 0.0
    %738 = vmatpush1.msra.mxu0 0.0
    %739 = vmatprep.subr.mxu0 0.0
    %740 = vmatpush1.msra.mxu0 0.0
    %741 = vmatprep.subr.mxu0 0.0
    %742 = vmatpush1.msra.mxu0 0.0
    %743 = vmatprep.subr.mxu0 0.0
    %744 = vmatpush1.msra.mxu0 0.0
    %745 = vmatprep.subr.mxu0 0.0
    %746 = vmatpush1.msra.mxu0 0.0
    %747 = vmatprep.subr.mxu0 0.0
    %748 = vmatpush1.msra.mxu0 0.0
    %749 = vmatprep.mubr.f32.mxu0 0.0
    %750 = vmatmul.mubr.f32.gmra.mrb[0].mxu0 %v683
    %v751 = vpop.f32.mrb[0].mxu0
    %v752 = vadd.f32 0.0, %v751
    %v753 = vpop.f32.mrb[0].mxu0
    %754 = vdwg.mxu0
    %v755 = vadd.f32 %v673, %v752
    %v756 = vld [vmem:[%s9] sm:$0x1]
    %v758 = vlaneseq
    %v759 = vshrl.u32 %v758, 7
    %v760 = vsub.s32 0, %v759
    %v761 = vrot.slane %v756, %v760
    %v763 = vadd.f32 %v755, %v761
    %v766 = vunpack.c.l.s4 1966171168
    %v767 = vunpack.c.0.s8 %v766
    %v768 = vlaneseq
    %v769 = vshrl.u32 %v768, 7
    %v770 = vsub.s32 %v767, %v769
    %v771 = vrot.slane %v763, %v770
    %v772 = vcombine.high %v771, %v771
    %v774 = vunpack.c.l.s4 1966171168
    %v775 = vunpack.c.0.s8 %v774
    %v776 = vlaneseq
    %v777 = vshrl.u32 %v776, 7
    %v778 = vsub.s32 %v775, %v777
    %v779 = vrot.slane %v771, %v778
    %v781 = vunpack.c.l.s4 1966171168
    %v782 = vunpack.c.0.s8 %v781
    %v783 = vlaneseq
    %v784 = vshrl.u32 %v783, 7
    %v785 = vsub.s32 %v782, %v784
    %v786 = vrot.slane %v772, %v785
    %vm789 = vcmask 516096
    %790 = vst.msk [vmem:[#allocation2] sm:$0x1] %vm789, %v779
    %791 = vst.msk [vmem:[#allocation2 + $0x1] sm:$0x1] %vm789, %v786
    // Predicated region
    $region42: #{tpu_custom_call.1} parent=1 // pred_check
      _
    $region43: #{tpu_custom_call.1} parent=1 // pred_check_branch
      %793 = sbr.rel (0) target = $region45
    $region44: #{tpu_custom_call.1} parent=1 // pred_region
      %s795 = ssub.s32 32, 32
      %796 = vsyncadd [#allocation3], %s795
      %s797 = sshll.u32 [#allocation2], 4
      %s798 = int_to_ptr.vmem [resolvable:$true] %s797
      %803 = dma.vmem_to_hbm [thread:$0]  %s798, 32, %s10, [#allocation3], 16, 16, 1
    $region45: #{tpu_custom_call.1} parent=1 // pred_fallthru
      _
    // Predicated region
    $region46: #{tpu_custom_call.1} parent=1 // pred_check
      _
    $region47: #{tpu_custom_call.1} parent=1 // pred_check_branch
      %805 = sbr.rel (0) target = $region49
    $region48: #{tpu_custom_call.1} parent=1 // pred_region
      %806 = dma.done [#allocation3], 32
    $region49: #{tpu_custom_call.1} parent=1 // pred_fallthru
      _
    %807 = vsyncpa [#allocation3], 1

</llo_original>
